<compile_context>
chip_gen: v6e
topology: v6e:2x2x1
jax: 0.10.0
libtpu: 0.0.40
codegen_flags: <defaults>
</compile_context>

<pallas_src>
import numpy as np
import jax
import jax.numpy as jnp
from jax import lax
from jax.experimental import pallas as pl
from jax.experimental.pallas import tpu as pltpu

EPS = float(np.finfo(np.float32).eps)  # == torch.finfo(torch.float32).eps


def _atan2(y, x):
    # atan2 from primitive VPU ops with a degree-11 minimax arctan polynomial
    # (max err ~1e-5 rad over [0, 1]).
    ax = jnp.abs(x)
    ay = jnp.abs(y)
    mx = jnp.maximum(ax, ay)
    mn = jnp.minimum(ax, ay)
    a = mn / jnp.maximum(mx, jnp.float32(1e-30))
    s = a * a
    p = jnp.float32(-0.01172120)
    p = p * s + jnp.float32(0.05265332)
    p = p * s + jnp.float32(-0.11643287)
    p = p * s + jnp.float32(0.19354346)
    p = p * s + jnp.float32(-0.33262347)
    p = p * s + jnp.float32(0.99997726)
    r = p * a
    r = jnp.where(ay > ax, jnp.float32(np.pi / 2.0) - r, r)
    r = jnp.where(x < 0, jnp.float32(np.pi) - r, r)
    r = jnp.where(y < 0, -r, r)
    return r


def _make_kernel(tile_f, hop, r, kp):
    def kernel(x_ref, basis_ref, mag_ref, phase_ref):
        # x_ref:     (C_pad, hop)   hop-sized chunks of x, resident per batch
        # basis_ref: (N, 2*kp)      [cos | -sin], K padded to lane width
        # mag_ref / phase_ref: (tile_f, kp)
        f0 = pl.multiple_of(pl.program_id(1) * tile_f, 8)

        # frames[f, :] = concat_j x_chunks[f + j, :]  ->  r shifted matmuls
        acc = jnp.dot(x_ref[pl.ds(f0, tile_f), :], basis_ref[0:hop, :],
                      preferred_element_type=jnp.float32)
        for j in range(1, r):
            acc = acc + jnp.dot(x_ref[pl.ds(f0 + j, tile_f), :],
                                basis_ref[j * hop:(j + 1) * hop, :],
                                preferred_element_type=jnp.float32)

        real = acc[:, :kp]
        imag = acc[:, kp:]
        eps = jnp.float32(EPS)
        power = jnp.maximum(real * real + imag * imag, eps)
        mag_ref[...] = power * lax.rsqrt(power)          # sqrt via EUP rsqrt
        phase_ref[...] = _atan2(imag + eps, real + eps)
    return kernel


def simple_stft(x, frame_len=1024, frame_hop=256, tile_f=256):
    B, T = x.shape
    N = frame_len
    hop = frame_hop
    assert N % hop == 0, "frame_len must be a multiple of frame_hop"
    assert T >= N, "signal shorter than one frame"
    r = N // hop
    K = N // 2 + 1
    Kp = ((K + 127) // 128) * 128            # lane-dense output width
    F = 1 + (T - N) // hop                   # center=False

    def _rup(v, m):
        return ((v + m - 1) // m) * m

    # Frame-tile selection: big tiles, multiples of 8, but keep >= 2 grid
    # steps overall so both TensorCores on v7x / megacore get work.
    tile_f = max(8, min(_rup(tile_f, 8), _rup(F, 8)))
    if B * ((_rup(F, 8) + tile_f - 1) // tile_f) < 2 and _rup(F, 8) >= 16:
        tile_f = _rup(_rup(F, 8) // 2, 8)
    n_tiles = (F + tile_f - 1) // tile_f
    F_pad = n_tiles * tile_f
    C_pad = F_pad + r - 1                    # chunks needed (incl. pad frames)

    # --- chunk the signal (no gather / no r-fold expansion): x read once ---
    c_avail = min(T // hop, C_pad)
    xc = x[:, :c_avail * hop].reshape(B, c_avail, hop).astype(jnp.float32)
    if c_avail < C_pad:
        xc = jnp.pad(xc, ((0, 0), (0, C_pad - c_avail), (0, 0)))

    # --- deterministic DFT basis: [cos | -sin], built in float64 on host ---
    n_idx = np.arange(N, dtype=np.float64)
    k_idx = np.arange(K, dtype=np.float64)
    ang = 2.0 * np.pi * np.outer(n_idx, k_idx) / N          # (N, K)
    basis_np = np.zeros((N, 2 * Kp), dtype=np.float32)
    basis_np[:, :K] = np.cos(ang)
    basis_np[:, Kp:Kp + K] = -np.sin(ang)
    basis = jnp.asarray(basis_np)

    kernel = _make_kernel(tile_f, hop, r, Kp)
    mag, phase = pl.pallas_call(
        kernel,
        out_shape=(jax.ShapeDtypeStruct((B, F_pad, Kp), jnp.float32),
                   jax.ShapeDtypeStruct((B, F_pad, Kp), jnp.float32)),
        grid_spec=pltpu.PrefetchScalarGridSpec(
            num_scalar_prefetch=0,
            grid=(B, n_tiles),
            in_specs=[
                # per-batch chunks: block index constant across the frame-tile
                # axis -> fetched once per batch, resident in VMEM
                pl.BlockSpec((None, C_pad, hop), lambda b, i: (b, 0, 0)),
                # concatenated basis: constant -> resident
                pl.BlockSpec((N, 2 * Kp), lambda b, i: (0, 0)),
            ],
            out_specs=[
                pl.BlockSpec((None, tile_f, Kp), lambda b, i: (b, i, 0)),
                pl.BlockSpec((None, tile_f, Kp), lambda b, i: (b, i, 0)),
            ],
        ),
        compiler_params=pltpu.CompilerParams(
            dimension_semantics=("parallel", "parallel"),
            vmem_limit_bytes=48 * 1024 * 1024),
    )(xc, basis)

    # slice off K/frame padding and return torch.stft convention [B, K, F]
    mag = mag[:, :F, :K].transpose(0, 2, 1)
    phase = phase[:, :F, :K].transpose(0, 2, 1)
    return mag, phase


def _run_and_check(x, frame_len, frame_hop):
    B, T = x.shape
    mag, phase = simple_stft(x, frame_len=frame_len, frame_hop=frame_hop)
    jax.block_until_ready((mag, phase))

    K = frame_len // 2 + 1
    F = 1 + (T - frame_len) // frame_hop
    assert mag.shape == (B, K, F) and phase.shape == (B, K, F)
    assert bool(jnp.all(jnp.isfinite(mag))) and bool(jnp.all(jnp.isfinite(phase)))
    # phase must be a valid angle
    assert bool(jnp.all(jnp.abs(phase) <= np.float32(np.pi) + 1e-3))

    # plain-JAX reference (validates fused framing + concatenated-basis matmul)
    idx = (jnp.arange(F) * frame_hop)[:, None] + jnp.arange(frame_len)[None, :]
    frames_ref = x[:, idx]                                            # (B,F,N)
    ang64 = 2.0 * np.pi * np.outer(np.arange(frame_len),
                                   np.arange(K)) / frame_len
    cos_ref = jnp.asarray(np.cos(ang64), jnp.float32)
    sin_ref = jnp.asarray(np.sin(ang64), jnp.float32)
    r_ref = jnp.einsum('bfn,nk->bfk', frames_ref, cos_ref,
                       precision=lax.Precision.HIGHEST)
    i_ref = -jnp.einsum('bfn,nk->bfk', frames_ref, sin_ref,
                        precision=lax.Precision.HIGHEST)
    mag_ref = jnp.sqrt(jnp.maximum(r_ref ** 2 + i_ref ** 2,
                                   jnp.float32(EPS))).transpose(0, 2, 1)
    phase_ref = jnp.arctan2(i_ref + jnp.float32(EPS),
                            r_ref + jnp.float32(EPS)).transpose(0, 2, 1)

    assert bool(jnp.allclose(mag, mag_ref, rtol=2e-3, atol=2e-3))

    # wrapped phase difference, checked only where magnitude is non-negligible
    # (near-zero bins are numerically unstable for atan2 in any implementation)
    d = jnp.abs(phase - phase_ref)
    d = jnp.minimum(d, 2.0 * np.float32(np.pi) - d)
    mask = mag_ref > 1e-3 * jnp.max(mag_ref)
    assert bool(jnp.all(jnp.where(mask, d, jnp.float32(0.0)) < 2e-2))


if __name__ == "__main__":
    key = jax.random.PRNGKey(0)
    k1, k2 = jax.random.split(key)

    # Small config (fast smoke test of the hop < 128 path): 13 frames, 65 bins.
    x_small = jax.random.normal(k1, (2, 512), dtype=jnp.float32)
    _run_and_check(x_small, frame_len=128, frame_hop=32)

    # Module-default config (frame_len=1024, frame_hop=256, lane-dense hop):
    # 5 frames, 513 bins.
    x_def = jax.random.normal(k2, (2, 2048), dtype=jnp.float32)
    _run_and_check(x_def, frame_len=1024, frame_hop=256)

    print("KERNEL_OK")
</pallas_src>

<mosaic_0001>
module attributes {stable_mosaic.version = 11 : i64} {
  func.func @kernel(%arg0: i32, %arg1: i32, %arg2: memref<1x19x32xf32, #tpu.memory_space<vmem>>, %arg3: memref<128x256xf32, #tpu.memory_space<vmem>>, %arg4: memref<1x16x128xf32, #tpu.memory_space<vmem>>, %arg5: memref<1x16x128xf32, #tpu.memory_space<vmem>>) attributes {dimension_semantics = [#tpu.dimension_semantics<parallel>, #tpu.dimension_semantics<parallel>], iteration_bounds = array<i64: 2, 1>, scalar_prefetch = 0 : i64, scratch_operands = 0 : i64, tpu.core_type = #tpu.core_type<tc>, window_params = [{transform_indices = @transform_0, window_bounds = array<i64: 1, 19, 32>}, {pipeline_mode = #tpu.pipeline_mode<synchronous>, transform_indices = @transform_1, window_bounds = array<i64: 128, 256>}, {transform_indices = @transform_2, window_bounds = array<i64: 1, 16, 128>}, {transform_indices = @transform_3, window_bounds = array<i64: 1, 16, 128>}]} {
    %c16_i32 = arith.constant 16 : i32
    %0 = arith.muli %arg1, %c16_i32 : i32
    %1 = tpu.assume_multiple %0, 8 : i32
    %c0 = arith.constant 0 : index
    %2 = arith.index_cast %1 : i32 to index
    %c0_0 = arith.constant 0 : index
    %3 = vector.load %arg2[%c0, %2, %c0_0] : memref<1x19x32xf32, #tpu.memory_space<vmem>>, vector<1x16x32xf32>
    %4 = vector.shape_cast %3 : vector<1x16x32xf32> to vector<16x32xf32>
    %c0_1 = arith.constant 0 : index
    %c0_2 = arith.constant 0 : index
    %5 = vector.load %arg3[%c0_1, %c0_2] : memref<128x256xf32, #tpu.memory_space<vmem>>, vector<32x256xf32>
    %cst = arith.constant dense<0.000000e+00> : vector<16x256xf32>
    %6 = tpu.matmul %4, %5, %cst {dimension_numbers = #tpu.dot_dimension_numbers<[1], [0], [0], [1], [0, 0, 1, 1], [], []>} : vector<16x32xf32>, vector<32x256xf32>, vector<16x256xf32> -> vector<16x256xf32>
    %c1_i32 = arith.constant 1 : i32
    %7 = arith.addi %1, %c1_i32 : i32
    %c0_3 = arith.constant 0 : index
    %8 = arith.index_cast %7 : i32 to index
    %c0_4 = arith.constant 0 : index
    %9 = vector.load %arg2[%c0_3, %8, %c0_4] : memref<1x19x32xf32, #tpu.memory_space<vmem>>, vector<1x16x32xf32>
    %10 = vector.shape_cast %9 : vector<1x16x32xf32> to vector<16x32xf32>
    %c32 = arith.constant 32 : index
    %c0_5 = arith.constant 0 : index
    %11 = vector.load %arg3[%c32, %c0_5] : memref<128x256xf32, #tpu.memory_space<vmem>>, vector<32x256xf32>
    %cst_6 = arith.constant dense<0.000000e+00> : vector<16x256xf32>
    %12 = tpu.matmul %10, %11, %cst_6 {dimension_numbers = #tpu.dot_dimension_numbers<[1], [0], [0], [1], [0, 0, 1, 1], [], []>} : vector<16x32xf32>, vector<32x256xf32>, vector<16x256xf32> -> vector<16x256xf32>
    %13 = arith.addf %6, %12 : vector<16x256xf32>
    %c2_i32 = arith.constant 2 : i32
    %14 = arith.addi %1, %c2_i32 : i32
    %c0_7 = arith.constant 0 : index
    %15 = arith.index_cast %14 : i32 to index
    %c0_8 = arith.constant 0 : index
    %16 = vector.load %arg2[%c0_7, %15, %c0_8] : memref<1x19x32xf32, #tpu.memory_space<vmem>>, vector<1x16x32xf32>
    %17 = vector.shape_cast %16 : vector<1x16x32xf32> to vector<16x32xf32>
    %c64 = arith.constant 64 : index
    %c0_9 = arith.constant 0 : index
    %18 = vector.load %arg3[%c64, %c0_9] : memref<128x256xf32, #tpu.memory_space<vmem>>, vector<32x256xf32>
    %cst_10 = arith.constant dense<0.000000e+00> : vector<16x256xf32>
    %19 = tpu.matmul %17, %18, %cst_10 {dimension_numbers = #tpu.dot_dimension_numbers<[1], [0], [0], [1], [0, 0, 1, 1], [], []>} : vector<16x32xf32>, vector<32x256xf32>, vector<16x256xf32> -> vector<16x256xf32>
    %20 = arith.addf %13, %19 : vector<16x256xf32>
    %c3_i32 = arith.constant 3 : i32
    %21 = arith.addi %1, %c3_i32 : i32
    %c0_11 = arith.constant 0 : index
    %22 = arith.index_cast %21 : i32 to index
    %c0_12 = arith.constant 0 : index
    %23 = vector.load %arg2[%c0_11, %22, %c0_12] : memref<1x19x32xf32, #tpu.memory_space<vmem>>, vector<1x16x32xf32>
    %24 = vector.shape_cast %23 : vector<1x16x32xf32> to vector<16x32xf32>
    %c96 = arith.constant 96 : index
    %c0_13 = arith.constant 0 : index
    %25 = vector.load %arg3[%c96, %c0_13] : memref<128x256xf32, #tpu.memory_space<vmem>>, vector<32x256xf32>
    %cst_14 = arith.constant dense<0.000000e+00> : vector<16x256xf32>
    %26 = tpu.matmul %24, %25, %cst_14 {dimension_numbers = #tpu.dot_dimension_numbers<[1], [0], [0], [1], [0, 0, 1, 1], [], []>} : vector<16x32xf32>, vector<32x256xf32>, vector<16x256xf32> -> vector<16x256xf32>
    %27 = arith.addf %20, %26 : vector<16x256xf32>
    %28 = vector.extract_strided_slice %27 {offsets = [0, 0], sizes = [16, 128], strides = [1, 1]} : vector<16x256xf32> to vector<16x128xf32>
    %29 = vector.extract_strided_slice %27 {offsets = [0, 128], sizes = [16, 128], strides = [1, 1]} : vector<16x256xf32> to vector<16x128xf32>
    %30 = arith.mulf %28, %28 : vector<16x128xf32>
    %31 = arith.mulf %29, %29 : vector<16x128xf32>
    %32 = arith.addf %30, %31 : vector<16x128xf32>
    %cst_15 = arith.constant 1.1920929E-7 : f32
    %33 = vector.broadcast %cst_15 : f32 to vector<16x128xf32>
    %34 = arith.maximumf %32, %33 : vector<16x128xf32>
    %35 = math.rsqrt %34 : vector<16x128xf32>
    %36 = arith.mulf %34, %35 : vector<16x128xf32>
    %c0_16 = arith.constant 0 : index
    %c0_17 = arith.constant 0 : index
    %c0_18 = arith.constant 0 : index
    %37 = vector.load %arg4[%c0_16, %c0_17, %c0_18] : memref<1x16x128xf32, #tpu.memory_space<vmem>>, vector<1x16x128xf32>
    %38 = vector.shape_cast %37 : vector<1x16x128xf32> to vector<16x128xf32>
    %39 = vector.shape_cast %36 : vector<16x128xf32> to vector<1x16x128xf32>
    tpu.vector_store %arg4[%c0_16, %c0_17, %c0_18], %39 {strides = array<i32>} : memref<1x16x128xf32, #tpu.memory_space<vmem>>, vector<1x16x128xf32>,
    %cst_19 = arith.constant 1.1920929E-7 : f32
    %40 = vector.broadcast %cst_19 : f32 to vector<16x128xf32>
    %41 = arith.addf %29, %40 : vector<16x128xf32>
    %cst_20 = arith.constant 1.1920929E-7 : f32
    %42 = vector.broadcast %cst_20 : f32 to vector<16x128xf32>
    %43 = arith.addf %28, %42 : vector<16x128xf32>
    %44 = math.absf %43 : vector<16x128xf32>
    %45 = math.absf %41 : vector<16x128xf32>
    %46 = arith.maximumf %44, %45 : vector<16x128xf32>
    %47 = arith.minimumf %44, %45 : vector<16x128xf32>
    %cst_21 = arith.constant 1.000000e-30 : f32
    %48 = vector.broadcast %cst_21 : f32 to vector<16x128xf32>
    %49 = arith.maximumf %46, %48 : vector<16x128xf32>
    %50 = arith.divf %47, %49 : vector<16x128xf32>
    %51 = arith.mulf %50, %50 : vector<16x128xf32>
    %cst_22 = arith.constant -1.172120e-02 : f32
    %52 = vector.broadcast %cst_22 : f32 to vector<16x128xf32>
    %53 = arith.mulf %52, %51 : vector<16x128xf32>
    %cst_23 = arith.constant 0.0526533201 : f32
    %54 = vector.broadcast %cst_23 : f32 to vector<16x128xf32>
    %55 = arith.addf %53, %54 : vector<16x128xf32>
    %56 = arith.mulf %55, %51 : vector<16x128xf32>
    %cst_24 = arith.constant -0.116432868 : f32
    %57 = vector.broadcast %cst_24 : f32 to vector<16x128xf32>
    %58 = arith.addf %56, %57 : vector<16x128xf32>
    %59 = arith.mulf %58, %51 : vector<16x128xf32>
    %cst_25 = arith.constant 0.193543464 : f32
    %60 = vector.broadcast %cst_25 : f32 to vector<16x128xf32>
    %61 = arith.addf %59, %60 : vector<16x128xf32>
    %62 = arith.mulf %61, %51 : vector<16x128xf32>
    %cst_26 = arith.constant -0.332623482 : f32
    %63 = vector.broadcast %cst_26 : f32 to vector<16x128xf32>
    %64 = arith.addf %62, %63 : vector<16x128xf32>
    %65 = arith.mulf %64, %51 : vector<16x128xf32>
    %cst_27 = arith.constant 0.999977231 : f32
    %66 = vector.broadcast %cst_27 : f32 to vector<16x128xf32>
    %67 = arith.addf %65, %66 : vector<16x128xf32>
    %68 = arith.mulf %67, %50 : vector<16x128xf32>
    %69 = arith.cmpf ogt, %45, %44 : vector<16x128xf32>
    %cst_28 = arith.constant 1.57079637 : f32
    %70 = vector.broadcast %cst_28 : f32 to vector<16x128xf32>
    %71 = arith.subf %70, %68 : vector<16x128xf32>
    %72 = arith.select %69, %71, %68 : vector<16x128xi1>, vector<16x128xf32>
    %cst_29 = arith.constant 0.000000e+00 : f32
    %73 = vector.broadcast %cst_29 : f32 to vector<16x128xf32>
    %74 = arith.cmpf olt, %43, %73 : vector<16x128xf32>
    %cst_30 = arith.constant 3.14159274 : f32
    %75 = vector.broadcast %cst_30 : f32 to vector<16x128xf32>
    %76 = arith.subf %75, %72 : vector<16x128xf32>
    %77 = arith.select %74, %76, %72 : vector<16x128xi1>, vector<16x128xf32>
    %cst_31 = arith.constant 0.000000e+00 : f32
    %78 = vector.broadcast %cst_31 : f32 to vector<16x128xf32>
    %79 = arith.cmpf olt, %41, %78 : vector<16x128xf32>
    %cst_32 = arith.constant 0.000000e+00 : f32
    %80 = vector.broadcast %cst_32 : f32 to vector<16x128xf32>
    %81 = arith.subf %80, %77 : vector<16x128xf32>
    %82 = arith.select %79, %81, %77 : vector<16x128xi1>, vector<16x128xf32>
    %c0_33 = arith.constant 0 : index
    %c0_34 = arith.constant 0 : index
    %c0_35 = arith.constant 0 : index
    %83 = vector.load %arg5[%c0_33, %c0_34, %c0_35] : memref<1x16x128xf32, #tpu.memory_space<vmem>>, vector<1x16x128xf32>
    %84 = vector.shape_cast %83 : vector<1x16x128xf32> to vector<16x128xf32>
    %85 = vector.shape_cast %82 : vector<16x128xf32> to vector<1x16x128xf32>
    tpu.vector_store %arg5[%c0_33, %c0_34, %c0_35], %85 {strides = array<i32>} : memref<1x16x128xf32, #tpu.memory_space<vmem>>, vector<1x16x128xf32>,
    return
  }
  func.func @transform_0(%arg0: i32, %arg1: i32) -> (i32, i32, i32) {
    %c0_i32 = arith.constant 0 : i32
    %c0_i32_0 = arith.constant 0 : i32
    %c0_i32_1 = arith.constant 0 : i32
    return %arg0, %c0_i32, %c0_i32_0 : i32, i32, i32
  }
  func.func @transform_1(%arg0: i32, %arg1: i32) -> (i32, i32) {
    %c0_i32 = arith.constant 0 : i32
    %c0_i32_0 = arith.constant 0 : i32
    %c0_i32_1 = arith.constant 0 : i32
    return %c0_i32, %c0_i32_0 : i32, i32
  }
  func.func @transform_2(%arg0: i32, %arg1: i32) -> (i32, i32, i32) {
    %c0_i32 = arith.constant 0 : i32
    %c0_i32_0 = arith.constant 0 : i32
    return %arg0, %arg1, %c0_i32 : i32, i32, i32
  }
  func.func @transform_3(%arg0: i32, %arg1: i32) -> (i32, i32, i32) {
    %c0_i32 = arith.constant 0 : i32
    %c0_i32_0 = arith.constant 0 : i32
    return %arg0, %arg1, %c0_i32 : i32, i32, i32
  }
}

</mosaic_0001>

<llo_original>
// kernel: tpu_custom_call.1
$region0: #{tpu_custom_call.1}
  #allocation0 [shape = 'u32[]', space=smem, size = 0x4, offset = 0x4, fixed_abs, tag = 'smem constant byte address 0x4 - core index']
  #allocation1 [shape = 'u32[144,128]{1,0:T(1,128)}', space=vmem, size = 0x12000, scoped, tag = 'internal scratch']
  %s0 = inlined_call_operand.vmem [shape: f32[2,19,32], index: 0, kind: input, shape index: {}]
  %s1 = inlined_call_operand.hbm [shape: f32[128,256], index: 1, kind: input, shape index: {}]
  %s2 = inlined_call_operand.hbm [shape: f32[2,16,128], index: 2, kind: output, shape index: {0}]
  %s3 = inlined_call_operand.hbm [shape: f32[2,16,128], index: 3, kind: output, shape index: {1}]
  %4 = xla_tuple %s2, %s3
  %s5 = sld [smem:[#allocation0]]
  $region53: #{tpu_custom_call.1} parent=0
    _
  %s7 = ssub.s32 1, %s5
  %s8 = scalar_select 0, %s7, %s5
  $region1: #{tpu_custom_call.1} parent=0
    #allocation2 [shape = 'u8[131072]{0}', space=vmem, size = 0x20000, scoped, tag = 'input window, operand 1, single buffered']
    #allocation3 [shape = 's32[2]{0}', space=sflag, size = 0x8, scoped, tag = 'scoped memory for tpu_custom_call.1']
    #allocation4 [shape = 's32[2]{0}', space=sflag, size = 0x8, scoped, tag = 'scoped memory for tpu_custom_call.1']
    #allocation5 [shape = 'u8[16384]{0}', space=vmem, size = 0x4000, scoped, tag = 'output window, operand 0']
    #allocation6 [shape = 'u8[16384]{0}', space=vmem, size = 0x4000, scoped, tag = 'output window, operand 1']
    #allocation7 [shape = 's32[2]{0}', space=sflag, size = 0x8, scoped, tag = 'scoped memory for tpu_custom_call.1']
    %9 = vsyncpa [#allocation3], 0
    %10 = vsyncpa [#allocation4], 0
    %s11 = scalar_lea.sflag [#allocation4], 1
    %12 = vsyncpa %s11, 0
    %13 = vsyncpa [#allocation7], 0
    %s14 = scalar_lea.sflag [#allocation7], 1
    %15 = vsyncpa %s14, 0
    loop: start=0, step=1, limit=4
    $region2: #{tpu_custom_call.1} parent=1 // loop_pre_header
      _
    $region3: #{tpu_custom_call.1} parent=1 // loop_header
      %s17 = sphi 0, %s21
      %p18 = scmp.ge.s32.totalorder %s17, 4
      %s24 = sphi 0, %s36
      %s25 = sphi 0, %s32
      %s26 = sphi 0, %s24
      %s27 = sphi 0, %s25
      %s28 = sphi 0, %s26
      %s29 = sphi 0, %s27
      %s39 = sphi 0, %s41
      %s42 = sphi 0, %s39
      %s43 = sphi 0, %s42
      %s59 = sphi 0, %s43
      %s63 = sphi 0, %s63
      %s65 = sphi 0, %s63
      %s66 = sphi 0, %s65
      %s80 = sphi 0, %s66
      %s88 = sphi 0, %s90
      %s91 = sphi 0, %s88
      %s92 = sphi 0, %s91
      %s108 = sphi 0, %s92
      %s116 = sphi 0, %s118
      %s119 = sphi 0, %s116
      %s120 = sphi 0, %s119
      %s136 = sphi 0, %s120
    $region4: #{tpu_custom_call.1} parent=1 // loop_header_branch
      %20 = sbr.rel (%p18) target = $region8
    $region5: #{tpu_custom_call.1} parent=1 // loop_body
      %s22 = ssub.s32 %s17, 1
      %s23 = ssub.s32 %s17, 2
      %s30 = sadd.s32 1, %s25
      %p31 = scmp.ge.s32.totalorder %s30, 1
      %s32 = scalar_select %p31, 0, %s30
      %s33 = sadd.s32 1, %s24
      %s34 = scalar_select %p31, %s33, %s24
      %p35 = scmp.ge.s32.totalorder %s34, 2
      %s36 = scalar_select %p35, 0, %s34
      %s37 = ssub.s32 %s24, %s36
      %p38 = scmp.eq.s32.totalorder %s37, 0
      %s40 = sadd.s32 %s39, 1
      %s41 = scalar_select %p38, %s39, %s40
      %p44 = pneg %p38
      %p45 = scmp.eq.s32.totalorder %s17, 1
      %p46 = por %p44, %p45
      %p47 = scmp.ne.s32.totalorder %s39, %s42
      %p48 = scmp.eq.s32.totalorder %s17, 0
      %p49 = por %p47, %p48
      %p50 = scmp.ne.s32.totalorder %s39, %s42
      %p51 = scmp.eq.s32.totalorder %s22, 1
      %p52 = por %p50, %p51
      %p53 = scmp.ne.s32.totalorder %s42, %s43
      %p54 = scmp.eq.s32.totalorder %s22, 0
      %p55 = por %p53, %p54
      %p56 = scmp.ne.s32.totalorder %s42, %s43
      %p57 = scmp.eq.s32.totalorder %s23, 1
      %p58 = por %p56, %p57
      %p60 = scmp.ne.s32.totalorder %s43, %s59
      %p61 = scmp.eq.s32.totalorder %s23, 0
      %p62 = por %p60, %p61
      %s64 = sadd.s32 %s63, 1
      %p67 = scmp.eq.s32.totalorder %s17, 1
      %p68 = scmp.ne.s32.totalorder %s63, %s65
      %p69 = scmp.eq.s32.totalorder %s17, 0
      %p70 = por %p68, %p69
      %p71 = scmp.ne.s32.totalorder %s63, %s65
      %p72 = scmp.eq.s32.totalorder %s22, 1
      %p73 = por %p71, %p72
      %p74 = scmp.ne.s32.totalorder %s65, %s66
      %p75 = scmp.eq.s32.totalorder %s22, 0
      %p76 = por %p74, %p75
      %p77 = scmp.ne.s32.totalorder %s65, %s66
      %p78 = scmp.eq.s32.totalorder %s23, 1
      %p79 = por %p77, %p78
      %p81 = scmp.ne.s32.totalorder %s66, %s80
      %p82 = scmp.eq.s32.totalorder %s23, 0
      %p83 = por %p81, %p82
      %s84 = ssub.s32 %s24, %s36
      %s85 = ssub.s32 %s25, %s32
      %s86 = sor.u32 %s84, %s85
      %p87 = scmp.eq.s32.totalorder %s86, 0
      %s89 = sadd.s32 %s88, 1
      %s90 = scalar_select %p87, %s88, %s89
      %p93 = pneg %p87
      %p94 = scmp.eq.s32.totalorder %s17, 1
      %p95 = por %p93, %p94
      %p96 = scmp.ne.s32.totalorder %s88, %s91
      %p97 = scmp.eq.s32.totalorder %s17, 0
      %p98 = por %p96, %p97
      %p99 = scmp.ne.s32.totalorder %s88, %s91
      %p100 = scmp.eq.s32.totalorder %s22, 1
      %p101 = por %p99, %p100
      %p102 = scmp.ne.s32.totalorder %s91, %s92
      %p103 = scmp.eq.s32.totalorder %s22, 0
      %p104 = por %p102, %p103
      %p105 = scmp.ne.s32.totalorder %s91, %s92
      %p106 = scmp.eq.s32.totalorder %s23, 1
      %p107 = por %p105, %p106
      %p109 = scmp.ne.s32.totalorder %s92, %s108
      %p110 = scmp.eq.s32.totalorder %s23, 0
      %p111 = por %p109, %p110
      %s112 = ssub.s32 %s24, %s36
      %s113 = ssub.s32 %s25, %s32
      %s114 = sor.u32 %s112, %s113
      %p115 = scmp.eq.s32.totalorder %s114, 0
      %s117 = sadd.s32 %s116, 1
      %s118 = scalar_select %p115, %s116, %s117
      %p121 = pneg %p115
      %p122 = scmp.eq.s32.totalorder %s17, 1
      %p123 = por %p121, %p122
      %p124 = scmp.ne.s32.totalorder %s116, %s119
      %p125 = scmp.eq.s32.totalorder %s17, 0
      %p126 = por %p124, %p125
      %p127 = scmp.ne.s32.totalorder %s116, %s119
      %p128 = scmp.eq.s32.totalorder %s22, 1
      %p129 = por %p127, %p128
      %p130 = scmp.ne.s32.totalorder %s119, %s120
      %p131 = scmp.eq.s32.totalorder %s22, 0
      %p132 = por %p130, %p131
      %p133 = scmp.ne.s32.totalorder %s119, %s120
      %p134 = scmp.eq.s32.totalorder %s23, 1
      %p135 = por %p133, %p134
      %p137 = scmp.ne.s32.totalorder %s120, %s136
      %p138 = scmp.eq.s32.totalorder %s23, 0
      %p139 = por %p137, %p138
      %p140 = scmp.le.s32.totalorder 1, %s17
      %p141 = scmp.lt.s32.totalorder %s17, 3
      %p142 = pnand %p140, %p141
      %p143 = pneg %p142
      // Predicated region
      $region9: #{tpu_custom_call.1} parent=5 // pred_check
        _
      $region10: #{tpu_custom_call.1} parent=5 // pred_check_branch
        %145 = sbr.rel (%p142) target = $region12
      $region11: #{tpu_custom_call.1} parent=5 // pred_region
        %s146 = ssub.s32 %s17, 1
        // Predicated region
        $region13: #{tpu_custom_call.1} parent=11 // pred_check
          %p147 = pneg %p76
        $region14: #{tpu_custom_call.1} parent=11 // pred_check_branch
          %149 = sbr.rel (%p147) target = $region16
        $region15: #{tpu_custom_call.1} parent=11 // pred_region
          %s151 = ssub.s32 4096, 4096
          %152 = vsyncadd [#allocation3], %s151
          %s153 = sshll.u32 [#allocation2], 4
          %s154 = int_to_ptr.vmem [resolvable:$true] %s153
          %159 = dma.hbm_to_vmem [thread:$0]  %s1, 4096, %s154, [#allocation3], 256, 256, 16
        $region16: #{tpu_custom_call.1} parent=11 // pred_fallthru
          _
      $region12: #{tpu_custom_call.1} parent=5 // pred_fallthru
        _
      %p160 = scmp.lt.s32.totalorder %s17, 2
      // Predicated region
      $region17: #{tpu_custom_call.1} parent=5 // pred_check
        %p161 = pneg %p160
      $region18: #{tpu_custom_call.1} parent=5 // pred_check_branch
        %163 = sbr.rel (%p161) target = $region20
      $region19: #{tpu_custom_call.1} parent=5 // pred_region
        // Predicated region
        $region21: #{tpu_custom_call.1} parent=19 // pred_check
          %p164 = pneg %p49
        $region22: #{tpu_custom_call.1} parent=19 // pred_check_branch
          %166 = sbr.rel (%p164) target = $region24
        $region23: #{tpu_custom_call.1} parent=19 // pred_region
          %p167 = scmp.lt.s32.totalorder %s24, 1
          %s168 = scalar_select %p167, %s24, 1
          %s169 = smul.addr %s168, 3
          %s170 = smul.addr %s169, 8
          %s171 = scalar_lea.vmem %s0, %s170
        $region24: #{tpu_custom_call.1} parent=19 // pred_fallthru
          _
      $region20: #{tpu_custom_call.1} parent=5 // pred_fallthru
        _
      %p172 = scmp.le.s32.totalorder 1, %s17
      %p173 = scmp.lt.s32.totalorder %s17, 3
      %p174 = pnand %p172, %p173
      %p175 = pneg %p174
      // Predicated region
      $region25: #{tpu_custom_call.1} parent=5 // pred_check
        _
      $region26: #{tpu_custom_call.1} parent=5 // pred_check_branch
        %177 = sbr.rel (%p174) target = $region28
      $region27: #{tpu_custom_call.1} parent=5 // pred_region
        %s178 = ssub.s32 %s17, 1
        // Predicated region
        $region29: #{tpu_custom_call.1} parent=27 // pred_check
          %p179 = pneg %p76
        $region30: #{tpu_custom_call.1} parent=27 // pred_check_branch
          %181 = sbr.rel (%p179) target = $region32
        $region31: #{tpu_custom_call.1} parent=27 // pred_region
          %182 = dma.done [#allocation3], 4096
        $region32: #{tpu_custom_call.1} parent=27 // pred_fallthru
          _
        %p183 = scmp.lt.s32.totalorder %s26, 1
        %s184 = scalar_select %p183, %s26, 1
        %s185 = smul.addr %s184, 3
        %s186 = smul.addr %s185, 8
        %s187 = scalar_lea.vmem %s0, %s186
        %p188 = pneg %p55
        %p189 = pneg %p52
        %p190 = pneg %p76
        %p191 = pneg %p73
        %p192 = pneg %p104
        %p193 = pneg %p101
        %s194 = sand.u32 %s91, 1
        %s195 = scalar_lea.sflag [#allocation4], %s194
        %s196 = sand.u32 %s91, 1
        %s197 = smul.addr %s196, 16
        %s198 = scalar_lea.vmem [#allocation5], %s197
        %p199 = pneg %p132
        %p200 = pneg %p129
        %s201 = sand.u32 %s119, 1
        %s202 = scalar_lea.sflag [#allocation7], %s201
        %s203 = sand.u32 %s119, 1
        %s204 = smul.addr %s203, 16
        %s205 = scalar_lea.vmem [#allocation6], %s204
        %p206 = scmp.lt.s32.totalorder %s26, 1
        %s207 = scalar_select %p206, %s26, 1
        %s208 = smul.addr %s207, 3
        %s209 = smul.addr %s208, 8
        %s210 = scalar_lea.vmem %s0, %s209
        %s211 = smul.u32 2, %s27
        %s212 = smul.u32 2, %s27
        %s213 = smul.u32 %s27, 16
        %s214 = scalar_lea.vmem %s210, %s213
        %v215 = vld [vmem:[%s214] sm:$0xff]
        %v216 = vld [vmem:[%s214 + $0x8] sm:$0xff]
        %v217 = vld [vmem:[#allocation2] sm:$0xff]
        %v218 = vld [vmem:[#allocation2 + $0x8] sm:$0xff]
        %v219 = vld [vmem:[#allocation2 + $0x10] sm:$0xff]
        %v220 = vld [vmem:[#allocation2 + $0x18] sm:$0xff]
        %v221 = vld [vmem:[#allocation2 + $0x20] sm:$0xff]
        %v222 = vld [vmem:[#allocation2 + $0x28] sm:$0xff]
        %v223 = vld [vmem:[#allocation2 + $0x30] sm:$0xff]
        %v224 = vld [vmem:[#allocation2 + $0x38] sm:$0xff]
        %s225 = sadd.s32 %s213, 1
        %s226 = scalar_lea.vmem %s210, %s225
        %v227 = vld [vmem:[%s226] sm:$0xff]
        %v228 = vld [vmem:[%s226 + $0x8] sm:$0xff]
        %v229 = vld [vmem:[#allocation2 + $0x40] sm:$0xff]
        %v230 = vld [vmem:[#allocation2 + $0x48] sm:$0xff]
        %v231 = vld [vmem:[#allocation2 + $0x50] sm:$0xff]
        %v232 = vld [vmem:[#allocation2 + $0x58] sm:$0xff]
        %v233 = vld [vmem:[#allocation2 + $0x60] sm:$0xff]
        %v234 = vld [vmem:[#allocation2 + $0x68] sm:$0xff]
        %v235 = vld [vmem:[#allocation2 + $0x70] sm:$0xff]
        %v236 = vld [vmem:[#allocation2 + $0x78] sm:$0xff]
        %vm237 = vcmask 261120
        %v239 = vsel %vm237, %v227, 0
        %v242 = vsel %vm237, %v228, 0
        %244 = vmatprep.subr.mxu0 0.0
        %245 = vmatpush1.msra.mxu0 0.0
        %246 = vmatprep.subr.mxu0 0.0
        %247 = vmatpush1.msra.mxu0 0.0
        %248 = vmatprep.subr.mxu0 0.0
        %249 = vmatpush1.msra.mxu0 0.0
        %250 = vmatprep.subr.mxu0 0.0
        %251 = vmatpush1.msra.mxu0 0.0
        %252 = vmatprep.subr.mxu0 0.0
        %253 = vmatpush1.msra.mxu0 0.0
        %254 = vmatprep.subr.mxu0 0.0
        %255 = vmatpush1.msra.mxu0 0.0
        %256 = vmatprep.subr.mxu0 0.0
        %257 = vmatpush1.msra.mxu0 0.0
        %258 = vmatprep.subr.mxu0 0.0
        %259 = vmatpush1.msra.mxu0 0.0
        %260 = vmatprep.subr.mxu0 0.0
        %261 = vmatpush1.msra.mxu0 0.0
        %262 = vmatprep.subr.mxu0 0.0
        %263 = vmatpush1.msra.mxu0 0.0
        %264 = vmatprep.subr.mxu0 0.0
        %265 = vmatpush1.msra.mxu0 0.0
        %266 = vmatprep.subr.mxu0 0.0
        %267 = vmatpush1.msra.mxu0 0.0
        %268 = vmatprep.subr.mxu0 %v236
        %269 = vmatpush1.msra.mxu0 %v235
        %270 = vmatprep.subr.mxu0 %v234
        %271 = vmatpush1.msra.mxu0 %v233
        %272 = vmatprep.subr.mxu0 %v232
        %273 = vmatpush1.msra.mxu0 %v231
        %274 = vmatprep.subr.mxu0 %v230
        %275 = vmatpush1.msra.mxu0 %v229
        %276 = vmatprep.subr.mxu0 0.0
        %277 = vmatpush2.msra.mxu0 0.0
        %278 = vmatprep.subr.mxu0 0.0
        %279 = vmatpush2.msra.mxu0 0.0
        %280 = vmatprep.subr.mxu0 0.0
        %281 = vmatpush2.msra.mxu0 0.0
        %282 = vmatprep.subr.mxu0 0.0
        %283 = vmatpush2.msra.mxu0 0.0
        %284 = vmatprep.subr.mxu0 0.0
        %285 = vmatpush2.msra.mxu0 0.0
        %286 = vmatprep.subr.mxu0 0.0
        %287 = vmatpush2.msra.mxu0 0.0
        %288 = vmatprep.subr.mxu0 0.0
        %289 = vmatpush2.msra.mxu0 0.0
        %290 = vmatprep.subr.mxu0 0.0
        %291 = vmatpush2.msra.mxu0 0.0
        %292 = vmatprep.subr.mxu0 0.0
        %293 = vmatpush2.msra.mxu0 0.0
        %294 = vmatprep.subr.mxu0 0.0
        %295 = vmatpush2.msra.mxu0 0.0
        %296 = vmatprep.subr.mxu0 0.0
        %297 = vmatpush2.msra.mxu0 0.0
        %298 = vmatprep.subr.mxu0 0.0
        %299 = vmatpush2.msra.mxu0 0.0
        %300 = vmatprep.subr.mxu0 0.0
        %301 = vmatpush2.msra.mxu0 0.0
        %302 = vmatprep.subr.mxu0 0.0
        %303 = vmatpush2.msra.mxu0 0.0
        %304 = vmatprep.subr.mxu0 0.0
        %305 = vmatpush2.msra.mxu0 0.0
        %306 = vmatprep.subr.mxu0 0.0
        %307 = vmatpush2.msra.mxu0 0.0
        %308 = vmatprep.mubr.f32.mxu0 0.0
        %309 = vmatmul.mubr.f32.gmra.mxu0 %v239
        %v310 = vpop.f32.mrf.mxu0
        %v311 = vadd.f32 0.0, %v310
        %v312 = vpop.f32.mrf.mxu0
        %v313 = vadd.f32 0.0, %v312
        %314 = vmatprep.mubr.f32.mxu0 0.0
        %315 = vmatmul.mubr.f32.gmra.mxu0 %v242
        %v316 = vpop.f32.mrf.mxu0
        %v317 = vadd.f32 0.0, %v316
        %v318 = vpop.f32.mrf.mxu0
        %v319 = vadd.f32 0.0, %v318
        %320 = vdwg.mxu0
        %v322 = vsel %vm237, %v215, 0
        %v325 = vsel %vm237, %v216, 0
        %327 = vmatprep.subr.mxu0 0.0
        %328 = vmatpush1.msra.mxu0 0.0
        %329 = vmatprep.subr.mxu0 0.0
        %330 = vmatpush1.msra.mxu0 0.0
        %331 = vmatprep.subr.mxu0 0.0
        %332 = vmatpush1.msra.mxu0 0.0
        %333 = vmatprep.subr.mxu0 0.0
        %334 = vmatpush1.msra.mxu0 0.0
        %335 = vmatprep.subr.mxu0 0.0
        %336 = vmatpush1.msra.mxu0 0.0
        %337 = vmatprep.subr.mxu0 0.0
        %338 = vmatpush1.msra.mxu0 0.0
        %339 = vmatprep.subr.mxu0 0.0
        %340 = vmatpush1.msra.mxu0 0.0
        %341 = vmatprep.subr.mxu0 0.0
        %342 = vmatpush1.msra.mxu0 0.0
        %343 = vmatprep.subr.mxu0 0.0
        %344 = vmatpush1.msra.mxu0 0.0
        %345 = vmatprep.subr.mxu0 0.0
        %346 = vmatpush1.msra.mxu0 0.0
        %347 = vmatprep.subr.mxu0 0.0
        %348 = vmatpush1.msra.mxu0 0.0
        %349 = vmatprep.subr.mxu0 0.0
        %350 = vmatpush1.msra.mxu0 0.0
        %351 = vmatprep.subr.mxu0 %v224
        %352 = vmatpush1.msra.mxu0 %v223
        %353 = vmatprep.subr.mxu0 %v222
        %354 = vmatpush1.msra.mxu0 %v221
        %355 = vmatprep.subr.mxu0 %v220
        %356 = vmatpush1.msra.mxu0 %v219
        %357 = vmatprep.subr.mxu0 %v218
        %358 = vmatpush1.msra.mxu0 %v217
        %359 = vmatprep.subr.mxu0 0.0
        %360 = vmatpush2.msra.mxu0 0.0
        %361 = vmatprep.subr.mxu0 0.0
        %362 = vmatpush2.msra.mxu0 0.0
        %363 = vmatprep.subr.mxu0 0.0
        %364 = vmatpush2.msra.mxu0 0.0
        %365 = vmatprep.subr.mxu0 0.0
        %366 = vmatpush2.msra.mxu0 0.0
        %367 = vmatprep.subr.mxu0 0.0
        %368 = vmatpush2.msra.mxu0 0.0
        %369 = vmatprep.subr.mxu0 0.0
        %370 = vmatpush2.msra.mxu0 0.0
        %371 = vmatprep.subr.mxu0 0.0
        %372 = vmatpush2.msra.mxu0 0.0
        %373 = vmatprep.subr.mxu0 0.0
        %374 = vmatpush2.msra.mxu0 0.0
        %375 = vmatprep.subr.mxu0 0.0
        %376 = vmatpush2.msra.mxu0 0.0
        %377 = vmatprep.subr.mxu0 0.0
        %378 = vmatpush2.msra.mxu0 0.0
        %379 = vmatprep.subr.mxu0 0.0
        %380 = vmatpush2.msra.mxu0 0.0
        %381 = vmatprep.subr.mxu0 0.0
        %382 = vmatpush2.msra.mxu0 0.0
        %383 = vmatprep.subr.mxu0 0.0
        %384 = vmatpush2.msra.mxu0 0.0
        %385 = vmatprep.subr.mxu0 0.0
        %386 = vmatpush2.msra.mxu0 0.0
        %387 = vmatprep.subr.mxu0 0.0
        %388 = vmatpush2.msra.mxu0 0.0
        %389 = vmatprep.subr.mxu0 0.0
        %390 = vmatpush2.msra.mxu0 0.0
        %391 = vmatprep.mubr.f32.mxu0 0.0
        %392 = vmatmul.mubr.f32.gmra.mxu0 %v322
        %v393 = vpop.f32.mrf.mxu0
        %v394 = vadd.f32 %v311, %v393
        %v395 = vpop.f32.mrf.mxu0
        %v396 = vadd.f32 %v313, %v395
        %397 = vmatprep.mubr.f32.mxu0 0.0
        %398 = vmatmul.mubr.f32.gmra.mxu0 %v325
        %v399 = vpop.f32.mrf.mxu0
        %v400 = vadd.f32 %v317, %v399
        %v401 = vpop.f32.mrf.mxu0
        %v402 = vadd.f32 %v319, %v401
        %403 = vdwg.mxu0
        %s404 = sadd.s32 %s213, 2
        %s405 = scalar_lea.vmem %s210, %s404
        %v406 = vld [vmem:[%s405] sm:$0xff]
        %v407 = vld [vmem:[%s405 + $0x8] sm:$0xff]
        %v408 = vld [vmem:[#allocation2 + $0x80] sm:$0xff]
        %v409 = vld [vmem:[#allocation2 + $0x88] sm:$0xff]
        %v410 = vld [vmem:[#allocation2 + $0x90] sm:$0xff]
        %v411 = vld [vmem:[#allocation2 + $0x98] sm:$0xff]
        %v412 = vld [vmem:[#allocation2 + $0xa0] sm:$0xff]
        %v413 = vld [vmem:[#allocation2 + $0xa8] sm:$0xff]
        %v414 = vld [vmem:[#allocation2 + $0xb0] sm:$0xff]
        %v415 = vld [vmem:[#allocation2 + $0xb8] sm:$0xff]
        %v417 = vsel %vm237, %v406, 0
        %v420 = vsel %vm237, %v407, 0
        %422 = vmatprep.subr.mxu0 0.0
        %423 = vmatpush1.msra.mxu0 0.0
        %424 = vmatprep.subr.mxu0 0.0
        %425 = vmatpush1.msra.mxu0 0.0
        %426 = vmatprep.subr.mxu0 0.0
        %427 = vmatpush1.msra.mxu0 0.0
        %428 = vmatprep.subr.mxu0 0.0
        %429 = vmatpush1.msra.mxu0 0.0
        %430 = vmatprep.subr.mxu0 0.0
        %431 = vmatpush1.msra.mxu0 0.0
        %432 = vmatprep.subr.mxu0 0.0
        %433 = vmatpush1.msra.mxu0 0.0
        %434 = vmatprep.subr.mxu0 0.0
        %435 = vmatpush1.msra.mxu0 0.0
        %436 = vmatprep.subr.mxu0 0.0
        %437 = vmatpush1.msra.mxu0 0.0
        %438 = vmatprep.subr.mxu0 0.0
        %439 = vmatpush1.msra.mxu0 0.0
        %440 = vmatprep.subr.mxu0 0.0
        %441 = vmatpush1.msra.mxu0 0.0
        %442 = vmatprep.subr.mxu0 0.0
        %443 = vmatpush1.msra.mxu0 0.0
        %444 = vmatprep.subr.mxu0 0.0
        %445 = vmatpush1.msra.mxu0 0.0
        %446 = vmatprep.subr.mxu0 %v415
        %447 = vmatpush1.msra.mxu0 %v414
        %448 = vmatprep.subr.mxu0 %v413
        %449 = vmatpush1.msra.mxu0 %v412
        %450 = vmatprep.subr.mxu0 %v411
        %451 = vmatpush1.msra.mxu0 %v410
        %452 = vmatprep.subr.mxu0 %v409
        %453 = vmatpush1.msra.mxu0 %v408
        %454 = vmatprep.subr.mxu0 0.0
        %455 = vmatpush2.msra.mxu0 0.0
        %456 = vmatprep.subr.mxu0 0.0
        %457 = vmatpush2.msra.mxu0 0.0
        %458 = vmatprep.subr.mxu0 0.0
        %459 = vmatpush2.msra.mxu0 0.0
        %460 = vmatprep.subr.mxu0 0.0
        %461 = vmatpush2.msra.mxu0 0.0
        %462 = vmatprep.subr.mxu0 0.0
        %463 = vmatpush2.msra.mxu0 0.0
        %464 = vmatprep.subr.mxu0 0.0
        %465 = vmatpush2.msra.mxu0 0.0
        %466 = vmatprep.subr.mxu0 0.0
        %467 = vmatpush2.msra.mxu0 0.0
        %468 = vmatprep.subr.mxu0 0.0
        %469 = vmatpush2.msra.mxu0 0.0
        %470 = vmatprep.subr.mxu0 0.0
        %471 = vmatpush2.msra.mxu0 0.0
        %472 = vmatprep.subr.mxu0 0.0
        %473 = vmatpush2.msra.mxu0 0.0
        %474 = vmatprep.subr.mxu0 0.0
        %475 = vmatpush2.msra.mxu0 0.0
        %476 = vmatprep.subr.mxu0 0.0
        %477 = vmatpush2.msra.mxu0 0.0
        %478 = vmatprep.subr.mxu0 0.0
        %479 = vmatpush2.msra.mxu0 0.0
        %480 = vmatprep.subr.mxu0 0.0
        %481 = vmatpush2.msra.mxu0 0.0
        %482 = vmatprep.subr.mxu0 0.0
        %483 = vmatpush2.msra.mxu0 0.0
        %484 = vmatprep.subr.mxu0 0.0
        %485 = vmatpush2.msra.mxu0 0.0
        %486 = vmatprep.mubr.f32.mxu0 0.0
        %487 = vmatmul.mubr.f32.gmra.mxu0 %v417
        %v488 = vpop.f32.mrf.mxu0
        %v489 = vadd.f32 0.0, %v488
        %v490 = vpop.f32.mrf.mxu0
        %v491 = vadd.f32 0.0, %v490
        %492 = vmatprep.mubr.f32.mxu0 0.0
        %493 = vmatmul.mubr.f32.gmra.mxu0 %v420
        %v494 = vpop.f32.mrf.mxu0
        %v495 = vadd.f32 0.0, %v494
        %v496 = vpop.f32.mrf.mxu0
        %v497 = vadd.f32 0.0, %v496
        %498 = vdwg.mxu0
        %v499 = vadd.f32 %v394, %v489
        %v500 = vadd.f32 %v396, %v491
        %v501 = vadd.f32 %v400, %v495
        %v502 = vadd.f32 %v402, %v497
        %s503 = sadd.s32 %s213, 3
        %s504 = scalar_lea.vmem %s210, %s503
        %v505 = vld [vmem:[%s504] sm:$0xff]
        %v506 = vld [vmem:[%s504 + $0x8] sm:$0xff]
        %v507 = vld [vmem:[#allocation2 + $0xc0] sm:$0xff]
        %v508 = vld [vmem:[#allocation2 + $0xc8] sm:$0xff]
        %v509 = vld [vmem:[#allocation2 + $0xd0] sm:$0xff]
        %v510 = vld [vmem:[#allocation2 + $0xd8] sm:$0xff]
        %v511 = vld [vmem:[#allocation2 + $0xe0] sm:$0xff]
        %v512 = vld [vmem:[#allocation2 + $0xe8] sm:$0xff]
        %v513 = vld [vmem:[#allocation2 + $0xf0] sm:$0xff]
        %v514 = vld [vmem:[#allocation2 + $0xf8] sm:$0xff]
        %v516 = vsel %vm237, %v505, 0
        %v519 = vsel %vm237, %v506, 0
        %521 = vmatprep.subr.mxu0 0.0
        %522 = vmatpush1.msra.mxu0 0.0
        %523 = vmatprep.subr.mxu0 0.0
        %524 = vmatpush1.msra.mxu0 0.0
        %525 = vmatprep.subr.mxu0 0.0
        %526 = vmatpush1.msra.mxu0 0.0
        %527 = vmatprep.subr.mxu0 0.0
        %528 = vmatpush1.msra.mxu0 0.0
        %529 = vmatprep.subr.mxu0 0.0
        %530 = vmatpush1.msra.mxu0 0.0
        %531 = vmatprep.subr.mxu0 0.0
        %532 = vmatpush1.msra.mxu0 0.0
        %533 = vmatprep.subr.mxu0 0.0
        %534 = vmatpush1.msra.mxu0 0.0
        %535 = vmatprep.subr.mxu0 0.0
        %536 = vmatpush1.msra.mxu0 0.0
        %537 = vmatprep.subr.mxu0 0.0
        %538 = vmatpush1.msra.mxu0 0.0
        %539 = vmatprep.subr.mxu0 0.0
        %540 = vmatpush1.msra.mxu0 0.0
        %541 = vmatprep.subr.mxu0 0.0
        %542 = vmatpush1.msra.mxu0 0.0
        %543 = vmatprep.subr.mxu0 0.0
        %544 = vmatpush1.msra.mxu0 0.0
        %545 = vmatprep.subr.mxu0 %v514
        %546 = vmatpush1.msra.mxu0 %v513
        %547 = vmatprep.subr.mxu0 %v512
        %548 = vmatpush1.msra.mxu0 %v511
        %549 = vmatprep.subr.mxu0 %v510
        %550 = vmatpush1.msra.mxu0 %v509
        %551 = vmatprep.subr.mxu0 %v508
        %552 = vmatpush1.msra.mxu0 %v507
        %553 = vmatprep.subr.mxu0 0.0
        %554 = vmatpush2.msra.mxu0 0.0
        %555 = vmatprep.subr.mxu0 0.0
        %556 = vmatpush2.msra.mxu0 0.0
        %557 = vmatprep.subr.mxu0 0.0
        %558 = vmatpush2.msra.mxu0 0.0
        %559 = vmatprep.subr.mxu0 0.0
        %560 = vmatpush2.msra.mxu0 0.0
        %561 = vmatprep.subr.mxu0 0.0
        %562 = vmatpush2.msra.mxu0 0.0
        %563 = vmatprep.subr.mxu0 0.0
        %564 = vmatpush2.msra.mxu0 0.0
        %565 = vmatprep.subr.mxu0 0.0
        %566 = vmatpush2.msra.mxu0 0.0
        %567 = vmatprep.subr.mxu0 0.0
        %568 = vmatpush2.msra.mxu0 0.0
        %569 = vmatprep.subr.mxu0 0.0
        %570 = vmatpush2.msra.mxu0 0.0
        %571 = vmatprep.subr.mxu0 0.0
        %572 = vmatpush2.msra.mxu0 0.0
        %573 = vmatprep.subr.mxu0 0.0
        %574 = vmatpush2.msra.mxu0 0.0
        %575 = vmatprep.subr.mxu0 0.0
        %576 = vmatpush2.msra.mxu0 0.0
        %577 = vmatprep.subr.mxu0 0.0
        %578 = vmatpush2.msra.mxu0 0.0
        %579 = vmatprep.subr.mxu0 0.0
        %580 = vmatpush2.msra.mxu0 0.0
        %581 = vmatprep.subr.mxu0 0.0
        %582 = vmatpush2.msra.mxu0 0.0
        %583 = vmatprep.subr.mxu0 0.0
        %584 = vmatpush2.msra.mxu0 0.0
        %585 = vmatprep.mubr.f32.mxu0 0.0
        %586 = vmatmul.mubr.f32.gmra.mxu0 %v516
        %v587 = vpop.f32.mrf.mxu0
        %v588 = vadd.f32 0.0, %v587
        %v589 = vpop.f32.mrf.mxu0
        %v590 = vadd.f32 0.0, %v589
        %591 = vmatprep.mubr.f32.mxu0 0.0
        %592 = vmatmul.mubr.f32.gmra.mxu0 %v519
        %v593 = vpop.f32.mrf.mxu0
        %v594 = vadd.f32 0.0, %v593
        %v595 = vpop.f32.mrf.mxu0
        %v596 = vadd.f32 0.0, %v595
        %597 = vdwg.mxu0
        %v598 = vadd.f32 %v499, %v588
        %v599 = vadd.f32 %v500, %v590
        %v600 = vadd.f32 %v501, %v594
        %v601 = vadd.f32 %v502, %v596
        %v602 = vmul.f32 %v598, %v598
        %v603 = vmul.f32 %v600, %v600
        %v604 = vmul.f32 %v599, %v599
        %v605 = vmul.f32 %v601, %v601
        %v606 = vadd.f32 %v602, %v604
        %v607 = vadd.f32 %v603, %v605
        %v608 = vmax.f32 %v606, 1.1920929e-07
        %v609 = vmax.f32 %v607, 1.1920929e-07
        %v610 = vrsqrt.pop %v608
        %v611 = vrsqrt.pop %v609
        %v612 = vmul.f32 %v608, %v610
        %v613 = vmul.f32 %v609, %v611
        %614 = vst [vmem:[%s198] sm:$0xff] %v612
        %615 = vst [vmem:[%s198 + $0x8] sm:$0xff] %v613
        %v616 = vadd.f32 %v599, 1.1920929e-07
        %v617 = vadd.f32 %v601, 1.1920929e-07
        %v618 = vadd.f32 %v598, 1.1920929e-07
        %v619 = vadd.f32 %v600, 1.1920929e-07
        %v620 = vand.u32 2147483647, %v618
        %v621 = vand.u32 2147483647, %v619
        %v622 = vand.u32 2147483647, %v616
        %v623 = vand.u32 2147483647, %v617
        %v624 = vmax.f32 %v620, %v622
        %v625 = vmax.f32 %v621, %v623
        %v626 = vmin.f32 %v620, %v622
        %v627 = vmin.f32 %v621, %v623
        %v628 = vmax.f32 %v624, 1e-30
        %v629 = vmax.f32 %v625, 1e-30
        %v630 = vrcp.pop %v628
        %v631 = vmul.f32 %v626, %v630
        %v632 = vrcp.pop %v629
        %v633 = vmul.f32 %v627, %v632
        %v634 = vmul.f32 %v631, %v631
        %v635 = vmul.f32 %v633, %v633
        %v636 = vmul.f32 %v634, -0.0117212
        %v637 = vmul.f32 %v635, -0.0117212
        %v638 = vadd.f32 %v636, 0.05265332
        %v639 = vadd.f32 %v637, 0.05265332
        %v640 = vmul.f32 %v638, %v634
        %v641 = vmul.f32 %v639, %v635
        %v642 = vadd.f32 %v640, -0.11643287
        %v643 = vadd.f32 %v641, -0.11643287
        %v644 = vmul.f32 %v642, %v634
        %v645 = vmul.f32 %v643, %v635
        %v646 = vadd.f32 %v644, 0.19354346
        %v647 = vadd.f32 %v645, 0.19354346
        %v648 = vmul.f32 %v646, %v634
        %v649 = vmul.f32 %v647, %v635
        %v650 = vadd.f32 %v648, -0.33262348
        %v651 = vadd.f32 %v649, -0.33262348
        %v652 = vmul.f32 %v650, %v634
        %v653 = vmul.f32 %v651, %v635
        %v654 = vadd.f32 %v652, 0.99997723
        %v655 = vadd.f32 %v653, 0.99997723
        %v656 = vmul.f32 %v654, %v631
        %v657 = vmul.f32 %v655, %v633
        %vm658 = vcmp.gt.f32.partialorder %v622, %v620
        %vm659 = vcmp.gt.f32.partialorder %v623, %v621
        %v660 = vsub.f32 1.5707964, %v656
        %v661 = vsub.f32 1.5707964, %v657
        %v662 = vsel %vm658, %v660, %v656
        %v663 = vsel %vm659, %v661, %v657
        %vm664 = vcmp.lt.f32.partialorder %v618, 0.0
        %vm665 = vcmp.lt.f32.partialorder %v619, 0.0
        %v666 = vsub.f32 3.1415927, %v662
        %v667 = vsub.f32 3.1415927, %v663
        %v668 = vsel %vm664, %v666, %v662
        %v669 = vsel %vm665, %v667, %v663
        %vm670 = vcmp.lt.f32.partialorder %v616, 0.0
        %vm671 = vcmp.lt.f32.partialorder %v617, 0.0
        %v672 = vsub.f32 0.0, %v668
        %v673 = vsub.f32 0.0, %v669
        %v674 = vsel %vm670, %v672, %v668
        %v675 = vsel %vm671, %v673, %v669
        %676 = vst [vmem:[%s205] sm:$0xff] %v674
        %677 = vst [vmem:[%s205 + $0x8] sm:$0xff] %v675
        %s678 = sand.u32 %s91, 1
        %s679 = scalar_lea.sflag [#allocation4], %s678
        %s680 = sand.u32 %s91, 1
        %s681 = smul.addr %s680, 16
        %s682 = scalar_lea.vmem [#allocation5], %s681
        %s683 = sand.u32 %s119, 1
        %s684 = scalar_lea.sflag [#allocation7], %s683
        %s685 = sand.u32 %s119, 1
        %s686 = smul.addr %s685, 16
        %s687 = scalar_lea.vmem [#allocation6], %s686
        // Predicated region
        $region33: #{tpu_custom_call.1} parent=27 // pred_check
          %p688 = pneg %p101
        $region34: #{tpu_custom_call.1} parent=27 // pred_check_branch
          %690 = sbr.rel (%p688) target = $region36
        $region35: #{tpu_custom_call.1} parent=27 // pred_region
          %s691 = smul.u32 2, %s27
          %s693 = ssub.s32 256, 256
          %694 = vsyncadd %s679, %s693
          %s695 = smul.addr %s26, 2
          %s696 = sadd.s32 %s691, %s695
          %s697 = smul.addr %s696, 128
          %s698 = scalar_lea.hbm %s2, %s697
          %s699 = sshll.u32 %s682, 4
          %s700 = int_to_ptr.vmem [resolvable:$true] %s699
          %705 = dma.vmem_to_hbm [thread:$0]  %s700, 256, %s698, %s679, 128, 128, 8
        $region36: #{tpu_custom_call.1} parent=27 // pred_fallthru
          _
        // Predicated region
        $region37: #{tpu_custom_call.1} parent=27 // pred_check
          %p706 = pneg %p129
        $region38: #{tpu_custom_call.1} parent=27 // pred_check_branch
          %708 = sbr.rel (%p706) target = $region40
        $region39: #{tpu_custom_call.1} parent=27 // pred_region
          %s709 = smul.u32 2, %s27
          %s711 = ssub.s32 256, 256
          %712 = vsyncadd %s684, %s711
          %s713 = smul.addr %s26, 2
          %s714 = sadd.s32 %s709, %s713
          %s715 = smul.addr %s714, 128
          %s716 = scalar_lea.hbm %s3, %s715
          %s717 = sshll.u32 %s687, 4
          %s718 = int_to_ptr.vmem [resolvable:$true] %s717
          %723 = dma.vmem_to_hbm [thread:$0]  %s718, 256, %s716, %s684, 128, 128, 8
        $region40: #{tpu_custom_call.1} parent=27 // pred_fallthru
          _
      $region28: #{tpu_custom_call.1} parent=5 // pred_fallthru
        _
      %p724 = scmp.le.s32.totalorder 2, %s17
      // Predicated region
      $region41: #{tpu_custom_call.1} parent=5 // pred_check
        %p725 = pneg %p724
      $region42: #{tpu_custom_call.1} parent=5 // pred_check_branch
        %727 = sbr.rel (%p725) target = $region44
      $region43: #{tpu_custom_call.1} parent=5 // pred_region
        %s728 = ssub.s32 %s17, 2
        // Predicated region
        $region45: #{tpu_custom_call.1} parent=43 // pred_check
          %p729 = pneg %p107
        $region46: #{tpu_custom_call.1} parent=43 // pred_check_branch
          %731 = sbr.rel (%p729) target = $region48
        $region47: #{tpu_custom_call.1} parent=43 // pred_region
          %s732 = sand.u32 %s92, 1
          %s733 = scalar_lea.sflag [#allocation4], %s732
          %s734 = sand.u32 %s92, 1
          %s735 = smul.addr %s734, 16
          %s736 = scalar_lea.vmem [#allocation5], %s735
          %737 = dma.done %s733, 256
        $region48: #{tpu_custom_call.1} parent=43 // pred_fallthru
          _
        // Predicated region
        $region49: #{tpu_custom_call.1} parent=43 // pred_check
          %p738 = pneg %p135
        $region50: #{tpu_custom_call.1} parent=43 // pred_check_branch
          %740 = sbr.rel (%p738) target = $region52
        $region51: #{tpu_custom_call.1} parent=43 // pred_region
          %s741 = sand.u32 %s120, 1
          %s742 = scalar_lea.sflag [#allocation7], %s741
          %s743 = sand.u32 %s120, 1
          %s744 = smul.addr %s743, 16
          %s745 = scalar_lea.vmem [#allocation6], %s744
          %746 = dma.done %s742, 256
        $region52: #{tpu_custom_call.1} parent=43 // pred_fallthru
          _
      $region44: #{tpu_custom_call.1} parent=5 // pred_fallthru
        _
    $region6: #{tpu_custom_call.1} parent=1 // loop_footer
      %s21 = sadd.s32 1, %s17
    $region7: #{tpu_custom_call.1} parent=1 // loop_footer_branch
      %16 = sbr.rel target = $region3
    $region8: #{tpu_custom_call.1} parent=1 // loop_exit
      _
    %747 = vsyncpa [#allocation3], 1
    %s748 = scalar_lea.sflag [#allocation3], 1
    %749 = vsyncpa %s748, 1
    %750 = vsyncpa [#allocation4], 1
    %s751 = scalar_lea.sflag [#allocation4], 1
    %752 = vsyncpa %s751, 1
    %753 = vsyncpa [#allocation7], 1
    %s754 = scalar_lea.sflag [#allocation7], 1
    %755 = vsyncpa %s754, 1

</llo_original>
